<compile_context>
chip_gen: v7x
topology: tpu7x:2x2x1
jax: 0.10.0
libtpu: 0.0.40
codegen_flags: <defaults>
</compile_context>

<pallas_src>
import functools

import jax
import jax.numpy as jnp
from jax.experimental import pallas as pl
from jax.experimental.pallas import tpu as pltpu


def _softmax_regression_kernel(x_ref, theta_ref, o_ref):
    # x_ref:     [TILE_N, D]   (streamed, double-buffered)
    # theta_ref: [D, 1]        (resident in VMEM)
    # o_ref:     [TILE_N, 1]
    x = x_ref[...].astype(jnp.float32)
    theta = theta_ref[...].astype(jnp.float32)

    # MXU matmul: [TILE_N, D] @ [D, 1] -> [TILE_N, 1]; hides under the HBM DMA.
    logits = jnp.dot(x, theta, preferred_element_type=jnp.float32)

    # Numerically stable softmax over the trailing (size-1) axis.
    m = jnp.max(logits, axis=-1, keepdims=True)
    e = jnp.exp(logits - m)
    denom = jnp.sum(e, axis=-1, keepdims=True)
    o_ref[...] = (e / denom).astype(o_ref.dtype)


def _pick_tile_n(n: int, d: int, itemsize: int, budget_bytes: int) -> int:
    """Largest N-tile whose x slab fits in `budget_bytes`, multiple of 8 when tiled."""
    if n <= 8:
        return n
    tile = budget_bytes // max(1, d * itemsize)
    tile = max(8, (tile // 8) * 8)          # (8,128) rule when the block tiles N
    if tile >= n:
        return n                            # full-extent block (constraint exempt)
    return tile


@functools.partial(jax.jit, static_argnames=("x_tile_budget_bytes",))
def softmax_regression(
    x: jax.Array,
    theta: jax.Array,
    *,
    x_tile_budget_bytes: int = 4 << 20,     # ~4 MiB per x buffer -> ~8 MiB pipelined
) -> jax.Array:
    """x: [N, D], theta: [D, 1] -> softmax(x @ theta, axis=-1): [N, 1] float32."""
    n, d = x.shape
    assert theta.shape == (d, 1), f"theta must be [{d}, 1], got {theta.shape}"

    itemsize = jnp.dtype(x.dtype).itemsize
    tile_n = _pick_tile_n(n, d, itemsize, x_tile_budget_bytes)
    grid = (pl.cdiv(n, tile_n),)

    # Real VMEM footprint: double-buffered x tiles + theta + out tiles, plus
    # headroom for Mosaic internal scratch.  Capped well inside v7x's 64 MiB.
    x_bytes = tile_n * d * itemsize
    theta_bytes = d * jnp.dtype(theta.dtype).itemsize
    out_bytes = tile_n * 4
    vmem_limit = 2 * (x_bytes + theta_bytes + out_bytes) + (8 << 20)
    vmem_limit = min(vmem_limit, 32 << 20)

    return pl.pallas_call(
        _softmax_regression_kernel,
        out_shape=jax.ShapeDtypeStruct((n, 1), jnp.float32),
        grid=grid,
        in_specs=[
            pl.BlockSpec((tile_n, d), lambda i: (i, 0)),   # x tiles stream over N
            pl.BlockSpec((d, 1), lambda i: (0, 0)),        # theta resident
        ],
        out_specs=pl.BlockSpec((tile_n, 1), lambda i: (i, 0)),
        compiler_params=pltpu.CompilerParams(
            # N tiles are independent -> shard across TensorCores on multi-TC
            # chips (v7x); no-op on single-TC v5e/v6e.
            dimension_semantics=("parallel",),
            vmem_limit_bytes=int(vmem_limit),
        ),
    )(x, theta)


if __name__ == "__main__":
    # Small shapes consistent with the module: x: [n, d], theta: [d, 1]
    N, D = 8, 32
    key = jax.random.PRNGKey(0)
    kx, kt = jax.random.split(key)
    x = jax.random.normal(kx, (N, D), dtype=jnp.float32)
    theta = jax.random.normal(kt, (D, 1), dtype=jnp.float32)  # torch.randn(dim, 1) analogue

    out = jax.block_until_ready(softmax_regression(x, theta))

    # Reference: plain JAX forward (softmax over the trailing axis of size 1).
    ref = jax.nn.softmax(x @ theta, axis=-1)
    assert out.shape == (N, 1), out.shape
    assert jnp.allclose(out, ref, atol=1e-5, rtol=1e-5), (out, ref)

    # Exercise the tiled path (grid > 1, partial last tile) with a small tile budget.
    N2, D2 = 1000, 128
    x2 = jax.random.normal(jax.random.PRNGKey(1), (N2, D2), dtype=jnp.float32)
    theta2 = jax.random.normal(jax.random.PRNGKey(2), (D2, 1), dtype=jnp.float32)
    out2 = jax.block_until_ready(
        softmax_regression(x2, theta2, x_tile_budget_bytes=256 << 10)  # 512-row tiles
    )
    ref2 = jax.nn.softmax(x2 @ theta2, axis=-1)
    assert out2.shape == (N2, 1)
    assert jnp.allclose(out2, ref2, atol=1e-5, rtol=1e-5)

    print("KERNEL_OK")
</pallas_src>

<mosaic_0001>
module attributes {stable_mosaic.version = 11 : i64} {
  func.func @_softmax_regression_kernel(%arg0: i32, %arg1: memref<8x32xf32, #tpu.memory_space<vmem>>, %arg2: memref<32x1xf32, #tpu.memory_space<vmem>>, %arg3: memref<8x1xf32, #tpu.memory_space<vmem>>) attributes {dimension_semantics = [#tpu.dimension_semantics<parallel>], iteration_bounds = array<i64: 1>, scalar_prefetch = 0 : i64, scratch_operands = 0 : i64, tpu.core_type = #tpu.core_type<tc>, window_params = [{transform_indices = @transform_0, window_bounds = array<i64: 8, 32>}, {pipeline_mode = #tpu.pipeline_mode<synchronous>, transform_indices = @transform_1, window_bounds = array<i64: 32, 1>}, {transform_indices = @transform_2, window_bounds = array<i64: 8, 1>}]} {
    %c0 = arith.constant 0 : index
    %c0_0 = arith.constant 0 : index
    %0 = vector.load %arg1[%c0, %c0_0] : memref<8x32xf32, #tpu.memory_space<vmem>>, vector<8x32xf32>
    %c0_1 = arith.constant 0 : index
    %c0_2 = arith.constant 0 : index
    %1 = vector.load %arg2[%c0_1, %c0_2] : memref<32x1xf32, #tpu.memory_space<vmem>>, vector<32x1xf32>
    %cst = arith.constant dense<0.000000e+00> : vector<8x1xf32>
    %2 = tpu.matmul %0, %1, %cst {dimension_numbers = #tpu.dot_dimension_numbers<[1], [0], [0], [1], [0, 0, 1, 1], [], []>} : vector<8x32xf32>, vector<32x1xf32>, vector<8x1xf32> -> vector<8x1xf32>
    %cst_3 = arith.constant dense<0xFF800000> : vector<8xf32>
    %3 = vector.multi_reduction <maximumf>, %2, %cst_3 [1] : vector<8x1xf32> to vector<8xf32>
    %4 = vector.shape_cast %3 : vector<8xf32> to vector<8x1xf32>
    %5 = arith.subf %2, %4 : vector<8x1xf32>
    %6 = math.exp %5 : vector<8x1xf32>
    %cst_4 = arith.constant dense<0.000000e+00> : vector<8xf32>
    %7 = vector.multi_reduction <add>, %6, %cst_4 [1] : vector<8x1xf32> to vector<8xf32>
    %8 = vector.shape_cast %7 : vector<8xf32> to vector<8x1xf32>
    %9 = arith.divf %6, %8 : vector<8x1xf32>
    %c0_5 = arith.constant 0 : index
    %c0_6 = arith.constant 0 : index
    %10 = vector.load %arg3[%c0_5, %c0_6] : memref<8x1xf32, #tpu.memory_space<vmem>>, vector<8x1xf32>
    tpu.vector_store %arg3[%c0_5, %c0_6], %9 {strides = array<i32>} : memref<8x1xf32, #tpu.memory_space<vmem>>, vector<8x1xf32>,
    return
  }
  func.func @transform_0(%arg0: i32) -> (i32, i32) {
    %c0_i32 = arith.constant 0 : i32
    %c0_i32_0 = arith.constant 0 : i32
    return %arg0, %c0_i32 : i32, i32
  }
  func.func @transform_1(%arg0: i32) -> (i32, i32) {
    %c0_i32 = arith.constant 0 : i32
    %c0_i32_0 = arith.constant 0 : i32
    %c0_i32_1 = arith.constant 0 : i32
    return %c0_i32, %c0_i32_0 : i32, i32
  }
  func.func @transform_2(%arg0: i32) -> (i32, i32) {
    %c0_i32 = arith.constant 0 : i32
    %c0_i32_0 = arith.constant 0 : i32
    return %arg0, %c0_i32 : i32, i32
  }
}

</mosaic_0001>

<llo_original>
// kernel: softmax_regression.1
$region0: #{softmax_regression.1}
  #allocation0 [shape = 'u32[]', space=smem, size = 0x4, offset = 0x4, fixed_abs, tag = 'smem constant byte address 0x4 - core index']
  #allocation1 [shape = 'u32[144,128]{1,0:T(1,128)}', space=vmem, size = 0x12000, scoped, tag = 'internal scratch']
  %s0 = inlined_call_operand.vmem [shape: f32[8,32], index: 0, kind: input, shape index: {}]
  %s1 = inlined_call_operand.vmem [shape: f32[32,1], index: 1, kind: input, shape index: {}]
  %s2 = inlined_call_operand.vmem [shape: f32[8,1], index: 2, kind: output, shape index: {}]
  %s3 = sld [smem:[#allocation0]]
  $region18: #{softmax_regression.1} parent=0
    _
  %s5 = ssub.s32 1, %s3
  %s6 = scalar_select 0, %s5, %s3
  // Predicated region
  $region2: #{softmax_regression.1} parent=0 // pred_check
    _
  $region3: #{softmax_regression.1} parent=0 // pred_check_branch
    %8 = sbr.rel (0) target = $region5
  $region4: #{softmax_regression.1} parent=0 // pred_region
    _
  $region5: #{softmax_regression.1} parent=0 // pred_fallthru
    _
  // Predicated region
  $region6: #{softmax_regression.1} parent=0 // pred_check
    _
  $region7: #{softmax_regression.1} parent=0 // pred_check_branch
    %10 = sbr.rel (0) target = $region9
  $region8: #{softmax_regression.1} parent=0 // pred_region
    _
  $region9: #{softmax_regression.1} parent=0 // pred_fallthru
    _
  %v11 = vld [vmem:[%s0] sm:$0xff]
  %v12 = vld [vmem:[%s1] sm:$0xff]
  %v13 = vld [vmem:[%s1 + $0x8] sm:$0xff]
  %v14 = vld [vmem:[%s1 + $0x10] sm:$0xff]
  %v15 = vld [vmem:[%s1 + $0x18] sm:$0xff]
  %vm16 = vcmask 261120
  %v18 = vsel %vm16, %v11, 0
  %20 = vmatprep.subr.mxu0 0.0
  %21 = vmatpush1.msra.mxu0 %v12
  %22 = vmatprep.subr.mxu0 0.0
  %23 = vmatpush1.msra.mxu0 %v13
  %24 = vmatprep.subr.mxu0 0.0
  %25 = vmatpush1.msra.mxu0 %v14
  %26 = vmatprep.subr.mxu0 0.0
  %27 = vmatpush1.msra.mxu0 %v15
  %28 = vmatprep.subr.mxu0 0.0
  %29 = vmatpush1.msra.mxu0 0.0
  %30 = vmatprep.subr.mxu0 0.0
  %31 = vmatpush1.msra.mxu0 0.0
  %32 = vmatprep.subr.mxu0 0.0
  %33 = vmatpush1.msra.mxu0 0.0
  %34 = vmatprep.subr.mxu0 0.0
  %35 = vmatpush1.msra.mxu0 0.0
  %36 = vmatprep.subr.mxu0 0.0
  %37 = vmatpush1.msra.mxu0 0.0
  %38 = vmatprep.subr.mxu0 0.0
  %39 = vmatpush1.msra.mxu0 0.0
  %40 = vmatprep.subr.mxu0 0.0
  %41 = vmatpush1.msra.mxu0 0.0
  %42 = vmatprep.subr.mxu0 0.0
  %43 = vmatpush1.msra.mxu0 0.0
  %44 = vmatprep.subr.mxu0 0.0
  %45 = vmatpush1.msra.mxu0 0.0
  %46 = vmatprep.subr.mxu0 0.0
  %47 = vmatpush1.msra.mxu0 0.0
  %48 = vmatprep.subr.mxu0 0.0
  %49 = vmatpush1.msra.mxu0 0.0
  %50 = vmatprep.subr.mxu0 0.0
  %51 = vmatpush1.msra.mxu0 0.0
  %52 = vmatprep.subr.mxu0 0.0
  %53 = vmatpush1.msra.mxu0 0.0
  %54 = vmatprep.subr.mxu0 0.0
  %55 = vmatpush1.msra.mxu0 0.0
  %56 = vmatprep.subr.mxu0 0.0
  %57 = vmatpush1.msra.mxu0 0.0
  %58 = vmatprep.subr.mxu0 0.0
  %59 = vmatpush1.msra.mxu0 0.0
  %60 = vmatprep.subr.mxu0 0.0
  %61 = vmatpush1.msra.mxu0 0.0
  %62 = vmatprep.subr.mxu0 0.0
  %63 = vmatpush1.msra.mxu0 0.0
  %64 = vmatprep.subr.mxu0 0.0
  %65 = vmatpush1.msra.mxu0 0.0
  %66 = vmatprep.subr.mxu0 0.0
  %67 = vmatpush1.msra.mxu0 0.0
  %68 = vmatprep.subr.mxu0 0.0
  %69 = vmatpush1.msra.mxu0 0.0
  %70 = vmatprep.subr.mxu0 0.0
  %71 = vmatpush1.msra.mxu0 0.0
  %72 = vmatprep.subr.mxu0 0.0
  %73 = vmatpush1.msra.mxu0 0.0
  %74 = vmatprep.subr.mxu0 0.0
  %75 = vmatpush1.msra.mxu0 0.0
  %76 = vmatprep.subr.mxu0 0.0
  %77 = vmatpush1.msra.mxu0 0.0
  %78 = vmatprep.subr.mxu0 0.0
  %79 = vmatpush1.msra.mxu0 0.0
  %80 = vmatprep.subr.mxu0 0.0
  %81 = vmatpush1.msra.mxu0 0.0
  %82 = vmatprep.subr.mxu0 0.0
  %83 = vmatpush1.msra.mxu0 0.0
  %84 = vmatprep.mubr.f32.mxu0 0.0
  %85 = vmatmul.mubr.f32.gmra.mrb[0].mxu0 %v18
  %v86 = vpop.f32.mrb[0].mxu0
  %v87 = vadd.f32 0.0, %v86
  %v88 = vpop.f32.mrb[0].mxu0
  %89 = vdwg.mxu0
  %v90 = vsub.f32 %v87, %v87
  %v91 = vmul.f32 %v90, 1.442695
  %v92 = vpow.pop %v91
  %v93 = vadd.f32 %v92, 0.0
  %v94 = vrcp.pop %v93
  %v95 = vmul.f32 %v92, %v94
  %vm96 = vcmask 7168
  %97 = vst.msk [vmem:[%s2] sm:$0xff] %vm96, %v95
  // Predicated region
  $region10: #{softmax_regression.1} parent=0 // pred_check
    _
  $region11: #{softmax_regression.1} parent=0 // pred_check_branch
    %99 = sbr.rel (0) target = $region13
  $region12: #{softmax_regression.1} parent=0 // pred_region
    _
  $region13: #{softmax_regression.1} parent=0 // pred_fallthru
    _
  // Predicated region
  $region14: #{softmax_regression.1} parent=0 // pred_check
    _
  $region15: #{softmax_regression.1} parent=0 // pred_check_branch
    %101 = sbr.rel (0) target = $region17
  $region16: #{softmax_regression.1} parent=0 // pred_region
    _
  $region17: #{softmax_regression.1} parent=0 // pred_fallthru
    _

</llo_original>
